<compile_context>
chip_gen: v7x
topology: tpu7x:2x2x1
jax: 0.10.0
libtpu: 0.0.40
codegen_flags: <defaults>
</compile_context>

<pallas_src>
import math

import jax
import jax.numpy as jnp
from jax.experimental import pallas as pl
from jax.experimental.pallas import tpu as pltpu


# ---------------------------------------------------------------------------
# Parameter ("buffer") setup — mirrors PositionalEncoding.__init__
# ---------------------------------------------------------------------------
def make_pe_table(d_model: int, max_seq_length: int = 5000) -> jnp.ndarray:
    """Returns pe of shape (max_seq_length, 1, d_model), float32."""
    position = jnp.arange(max_seq_length, dtype=jnp.float32)[:, None]          # (L, 1)
    div_term = jnp.exp(
        jnp.arange(0, d_model, 2, dtype=jnp.float32) * (-math.log(10000.0) / d_model)
    )                                                                           # (ceil(D/2),)
    angles = position * div_term                                                # (L, ceil(D/2))
    pe = jnp.zeros((max_seq_length, d_model), dtype=jnp.float32)
    pe = pe.at[:, 0::2].set(jnp.sin(angles))
    # Guard the odd-d_model latent bug in the reference: cos gets floor(D/2) cols.
    pe = pe.at[:, 1::2].set(jnp.cos(angles)[:, : d_model // 2])
    # unsqueeze(0).transpose(0, 1) -> (max_seq_length, 1, d_model)
    return pe[:, None, :]


# ---------------------------------------------------------------------------
# Pallas kernel: broadcast add of the positional slice onto x
# ---------------------------------------------------------------------------
def _pos_enc_add_kernel(x_ref, pe_ref, o_ref):
    # x_ref / o_ref : (TB, TS, D)
    # pe_ref        : (TB, 1, D)   — broadcast over the seq-tile axis
    # Add in f32 for accuracy, store in the (possibly narrower) output dtype;
    # for f32 inputs every cast is a no-op.
    x = x_ref[...].astype(jnp.float32)
    p = pe_ref[...].astype(jnp.float32)
    o_ref[...] = (x + p).astype(o_ref.dtype)


def _round_up(n: int, m: int) -> int:
    return -(-n // m) * m


def positional_encoding_forward(
    x: jnp.ndarray,
    pe: jnp.ndarray,
    *,
    target_block_bytes: int = 4 << 20,   # ~4 MiB per x/out block
    donate_x: bool = False,              # caller must donate x if True
) -> jnp.ndarray:
    """x: (B, S, D); pe: (max_seq_length, 1, D). Returns x + pe[:B] (broadcast over S)."""
    B, S, D = x.shape
    max_len, one, d_pe = pe.shape
    assert one == 1 and d_pe == D, "pe must have shape (max_seq_length, 1, d_model)"
    assert B <= max_len, (
        f"first axis {B} exceeds max_seq_length {max_len}; pe[:B] would be short "
        "(this mirrors the PyTorch module's indexing of pe by x.size(0))"
    )

    # Output keeps x's dtype: HBM traffic stays narrow for bf16 models.
    # (Strict PyTorch type promotion would upcast bf16+f32 -> f32; the add is
    # still performed in f32 inside the kernel, only storage is narrow.)
    out_dtype = x.dtype
    itemsize = jnp.dtype(out_dtype).itemsize
    pe_itemsize = jnp.dtype(pe.dtype).itemsize

    # Sublane granularity for the seq-tile dim (f32: 8, bf16: 16, int8/fp8: 32).
    sub = {4: 8, 2: 16, 1: 32}.get(itemsize, 8)

    # --- seq tile: biggest multiple of `sub` fitting ~target_block_bytes ----
    rows_target = max(sub, (target_block_bytes // max(D * itemsize, 1)) // sub * sub)
    if S <= rows_target:
        TS = S                              # full extent — exempt from 8-divisibility
    else:
        TS = rows_target                    # multiple of sublane granularity
    grid_s = pl.cdiv(S, TS)                 # ragged last block handled by Pallas

    # --- batch tile: amortize per-grid-step overhead when the whole sequence
    #     fits one tile, but always keep >= 2 grid steps along a parallel axis
    #     so v7x megacore can shard the work across both TensorCores ---------
    TB = 1
    if grid_s == 1:
        if B >= 2:
            per_row_bytes = S * D * itemsize
            TB = max(1, min(B // 2, target_block_bytes // max(per_row_bytes, 1)))
            while B % TB:                   # keep TB | B (no ragged batch blocks)
                TB -= 1
        elif S >= 2 * sub:
            # B == 1: split the seq axis instead.
            ts_half = _round_up(-(-S // 2), sub)
            if ts_half < S:
                TS = ts_half
                grid_s = pl.cdiv(S, TS)
    grid_b = B // TB

    pe_slice = pe[:B]                       # (B, 1, D) — tiny, stays in its own dtype

    # --- VMEM budget: in + out double-buffered, pe double-buffered ----------
    block_bytes = TB * TS * D * itemsize
    pe_bytes = TB * D * pe_itemsize
    vmem_needed = 2 * (2 * block_bytes) + 2 * pe_bytes + (1 << 20)
    vmem_limit = int(min(48 << 20, max(vmem_needed, 16 << 20)))   # <=48 MiB: v7x headroom

    cost = pl.CostEstimate(
        flops=B * S * D,
        transcendentals=0,
        bytes_accessed=2 * B * S * D * itemsize + B * D * pe_itemsize,
    )

    extra_kwargs = {}
    if donate_x:
        # x and out have identical shape/dtype; reuse the HBM buffer.
        extra_kwargs["input_output_aliases"] = {0: 0}

    return pl.pallas_call(
        _pos_enc_add_kernel,
        out_shape=jax.ShapeDtypeStruct((B, S, D), out_dtype),
        grid_spec=pltpu.PrefetchScalarGridSpec(
            num_scalar_prefetch=0,
            grid=(grid_b, grid_s),
            in_specs=[
                pl.BlockSpec((TB, TS, D), lambda b, s: (b, s, 0)),
                # pe block index depends only on b → fetched once per batch
                # tile and reused (VMEM-resident) across all inner seq tiles.
                pl.BlockSpec((TB, 1, D), lambda b, s: (b, 0, 0)),
            ],
            out_specs=pl.BlockSpec((TB, TS, D), lambda b, s: (b, s, 0)),
        ),
        compiler_params=pltpu.CompilerParams(
            dimension_semantics=("parallel", "parallel"),
            vmem_limit_bytes=vmem_limit,
        ),
        cost_estimate=cost,
        **extra_kwargs,
    )(x, pe_slice)


if __name__ == "__main__":
    key = jax.random.PRNGKey(0)

    # --- Test 1: small aligned shapes, f32, matches the forward contract ----
    B, S, D = 2, 8, 32
    max_seq_length = 64
    k1, k2, k3 = jax.random.split(key, 3)

    x = jax.random.normal(k1, (B, S, D), dtype=jnp.float32)
    pe = make_pe_table(D, max_seq_length)                   # (max_seq_length, 1, D)

    out = jax.block_until_ready(positional_encoding_forward(x, pe))
    ref = x + pe[:B]                                        # (B, 1, D) broadcast over seq
    assert out.shape == (B, S, D) and out.dtype == ref.dtype
    assert jnp.allclose(out, ref, atol=1e-6), "mismatch vs reference (test 1)"

    # --- Test 2: misaligned S / D — exercises the ragged (masked-edge) path,
    #     no wrapper pad/slice involved --------------------------------------
    B2, S2, D2 = 3, 20, 48
    x2 = jax.random.normal(k2, (B2, S2, D2), dtype=jnp.float32)
    pe2 = make_pe_table(D2, max_seq_length)
    out2 = jax.block_until_ready(
        positional_encoding_forward(x2, pe2, target_block_bytes=2048)  # force seq tiling
    )
    ref2 = x2 + pe2[:B2]
    assert jnp.allclose(out2, ref2, atol=1e-6), "mismatch vs reference (test 2)"

    # --- Test 3: bf16 activations stay bf16 in HBM; add done in f32 ---------
    B3, S3, D3 = 2, 16, 32
    x3 = jax.random.normal(k3, (B3, S3, D3), dtype=jnp.float32).astype(jnp.bfloat16)
    pe3 = make_pe_table(D3, max_seq_length)
    out3 = jax.block_until_ready(positional_encoding_forward(x3, pe3))
    ref3 = (x3.astype(jnp.float32) + pe3[:B3]).astype(jnp.bfloat16)
    assert out3.dtype == jnp.bfloat16
    assert jnp.allclose(out3.astype(jnp.float32), ref3.astype(jnp.float32), atol=1e-2), \
        "mismatch vs reference (test 3)"

    print("KERNEL_OK")
</pallas_src>

<mosaic_0001>
module attributes {stable_mosaic.version = 11 : i64} {
  func.func @_pos_enc_add_kernel(%arg0: i32, %arg1: i32, %arg2: memref<1x8x32xf32, #tpu.memory_space<vmem>>, %arg3: memref<1x1x32xf32, #tpu.memory_space<vmem>>, %arg4: memref<1x8x32xf32, #tpu.memory_space<vmem>>) attributes {dimension_semantics = [#tpu.dimension_semantics<parallel>, #tpu.dimension_semantics<parallel>], iteration_bounds = array<i64: 2, 1>, scalar_prefetch = 0 : i64, scratch_operands = 0 : i64, tpu.core_type = #tpu.core_type<tc>, window_params = [{transform_indices = @transform_0, window_bounds = array<i64: 1, 8, 32>}, {transform_indices = @transform_1, window_bounds = array<i64: 1, 1, 32>}, {transform_indices = @transform_2, window_bounds = array<i64: 1, 8, 32>}]} {
    %c0 = arith.constant 0 : index
    %c0_0 = arith.constant 0 : index
    %c0_1 = arith.constant 0 : index
    %0 = vector.load %arg2[%c0, %c0_0, %c0_1] : memref<1x8x32xf32, #tpu.memory_space<vmem>>, vector<1x8x32xf32>
    %c0_2 = arith.constant 0 : index
    %c0_3 = arith.constant 0 : index
    %c0_4 = arith.constant 0 : index
    %1 = vector.load %arg3[%c0_2, %c0_3, %c0_4] : memref<1x1x32xf32, #tpu.memory_space<vmem>>, vector<1x1x32xf32>
    %2 = vector.broadcast %1 : vector<1x1x32xf32> to vector<1x8x32xf32>
    %3 = arith.addf %0, %2 : vector<1x8x32xf32>
    %c0_5 = arith.constant 0 : index
    %c0_6 = arith.constant 0 : index
    %c0_7 = arith.constant 0 : index
    %4 = vector.load %arg4[%c0_5, %c0_6, %c0_7] : memref<1x8x32xf32, #tpu.memory_space<vmem>>, vector<1x8x32xf32>
    tpu.vector_store %arg4[%c0_5, %c0_6, %c0_7], %3 {strides = array<i32>} : memref<1x8x32xf32, #tpu.memory_space<vmem>>, vector<1x8x32xf32>,
    return
  }
  func.func @transform_0(%arg0: i32, %arg1: i32) -> (i32, i32, i32) {
    %c0_i32 = arith.constant 0 : i32
    %c0_i32_0 = arith.constant 0 : i32
    return %arg0, %arg1, %c0_i32 : i32, i32, i32
  }
  func.func @transform_1(%arg0: i32, %arg1: i32) -> (i32, i32, i32) {
    %c0_i32 = arith.constant 0 : i32
    %c0_i32_0 = arith.constant 0 : i32
    %c0_i32_1 = arith.constant 0 : i32
    return %arg0, %c0_i32, %c0_i32_0 : i32, i32, i32
  }
  func.func @transform_2(%arg0: i32, %arg1: i32) -> (i32, i32, i32) {
    %c0_i32 = arith.constant 0 : i32
    %c0_i32_0 = arith.constant 0 : i32
    return %arg0, %arg1, %c0_i32 : i32, i32, i32
  }
}

</mosaic_0001>

<llo_original>
// kernel: tpu_custom_call.1
$region0: #{tpu_custom_call.1}
  #allocation0 [shape = 'u32[]', space=smem, size = 0x4, offset = 0x4, fixed_abs, tag = 'smem constant byte address 0x4 - core index']
  #allocation1 [shape = 'u32[144,128]{1,0:T(1,128)}', space=vmem, size = 0x12000, scoped, tag = 'internal scratch']
  %s0 = inlined_call_operand.hbm [shape: f32[2,8,32], index: 0, kind: input, shape index: {}]
  %s1 = inlined_call_operand.vmem [shape: f32[2,1,32], index: 1, kind: input, shape index: {}]
  %s2 = inlined_call_operand.hbm [shape: f32[2,8,32], index: 2, kind: output, shape index: {}]
  %s3 = sld [smem:[#allocation0]]
  $region45: #{tpu_custom_call.1} parent=0
    _
  %s5 = ssub.s32 1, %s3
  %s6 = scalar_select 0, %s5, %s3
  $region1: #{tpu_custom_call.1} parent=0
    #allocation2 [shape = 'u8[8192]{0}', space=vmem, size = 0x2000, scoped, tag = 'input window, operand 0']
    #allocation3 [shape = 's32[2]{0}', space=sflag, size = 0x8, scoped, tag = 'scoped memory for tpu_custom_call.1']
    #allocation4 [shape = 's32[2]{0}', space=sflag, size = 0x8, scoped, tag = 'scoped memory for tpu_custom_call.1']
    #allocation5 [shape = 'u8[8192]{0}', space=vmem, size = 0x2000, scoped, tag = 'output window, operand 0']
    %7 = vsyncpa [#allocation3], 0
    %s8 = scalar_lea.sflag [#allocation3], 1
    %9 = vsyncpa %s8, 0
    %10 = vsyncpa [#allocation4], 0
    %s11 = scalar_lea.sflag [#allocation4], 1
    %12 = vsyncpa %s11, 0
    loop: start=0, step=1, limit=4
    $region2: #{tpu_custom_call.1} parent=1 // loop_pre_header
      _
    $region3: #{tpu_custom_call.1} parent=1 // loop_header
      %s14 = sphi 0, %s18
      %p15 = scmp.ge.s32.totalorder %s14, 4
      %s21 = sphi 0, %s33
      %s22 = sphi 0, %s29
      %s23 = sphi 0, %s21
      %s24 = sphi 0, %s22
      %s25 = sphi 0, %s23
      %s26 = sphi 0, %s24
      %s38 = sphi 0, %s40
      %s41 = sphi 0, %s38
      %s42 = sphi 0, %s41
      %s58 = sphi 0, %s42
      %s64 = sphi 0, %s66
      %s67 = sphi 0, %s64
      %s68 = sphi 0, %s67
      %s84 = sphi 0, %s68
      %s92 = sphi 0, %s94
      %s95 = sphi 0, %s92
      %s96 = sphi 0, %s95
      %s112 = sphi 0, %s96
    $region4: #{tpu_custom_call.1} parent=1 // loop_header_branch
      %17 = sbr.rel (%p15) target = $region8
    $region5: #{tpu_custom_call.1} parent=1 // loop_body
      %s19 = ssub.s32 %s14, 1
      %s20 = ssub.s32 %s14, 2
      %s27 = sadd.s32 1, %s22
      %p28 = scmp.ge.s32.totalorder %s27, 1
      %s29 = scalar_select %p28, 0, %s27
      %s30 = sadd.s32 1, %s21
      %s31 = scalar_select %p28, %s30, %s21
      %p32 = scmp.ge.s32.totalorder %s31, 2
      %s33 = scalar_select %p32, 0, %s31
      %s34 = ssub.s32 %s21, %s33
      %s35 = ssub.s32 %s22, %s29
      %s36 = sor.u32 %s34, %s35
      %p37 = scmp.eq.s32.totalorder %s36, 0
      %s39 = sadd.s32 %s38, 1
      %s40 = scalar_select %p37, %s38, %s39
      %p43 = pneg %p37
      %p44 = scmp.eq.s32.totalorder %s14, 1
      %p45 = por %p43, %p44
      %p46 = scmp.ne.s32.totalorder %s38, %s41
      %p47 = scmp.eq.s32.totalorder %s14, 0
      %p48 = por %p46, %p47
      %p49 = scmp.ne.s32.totalorder %s38, %s41
      %p50 = scmp.eq.s32.totalorder %s19, 1
      %p51 = por %p49, %p50
      %p52 = scmp.ne.s32.totalorder %s41, %s42
      %p53 = scmp.eq.s32.totalorder %s19, 0
      %p54 = por %p52, %p53
      %p55 = scmp.ne.s32.totalorder %s41, %s42
      %p56 = scmp.eq.s32.totalorder %s20, 1
      %p57 = por %p55, %p56
      %p59 = scmp.ne.s32.totalorder %s42, %s58
      %p60 = scmp.eq.s32.totalorder %s20, 0
      %p61 = por %p59, %p60
      %s62 = ssub.s32 %s21, %s33
      %p63 = scmp.eq.s32.totalorder %s62, 0
      %s65 = sadd.s32 %s64, 1
      %s66 = scalar_select %p63, %s64, %s65
      %p69 = pneg %p63
      %p70 = scmp.eq.s32.totalorder %s14, 1
      %p71 = por %p69, %p70
      %p72 = scmp.ne.s32.totalorder %s64, %s67
      %p73 = scmp.eq.s32.totalorder %s14, 0
      %p74 = por %p72, %p73
      %p75 = scmp.ne.s32.totalorder %s64, %s67
      %p76 = scmp.eq.s32.totalorder %s19, 1
      %p77 = por %p75, %p76
      %p78 = scmp.ne.s32.totalorder %s67, %s68
      %p79 = scmp.eq.s32.totalorder %s19, 0
      %p80 = por %p78, %p79
      %p81 = scmp.ne.s32.totalorder %s67, %s68
      %p82 = scmp.eq.s32.totalorder %s20, 1
      %p83 = por %p81, %p82
      %p85 = scmp.ne.s32.totalorder %s68, %s84
      %p86 = scmp.eq.s32.totalorder %s20, 0
      %p87 = por %p85, %p86
      %s88 = ssub.s32 %s21, %s33
      %s89 = ssub.s32 %s22, %s29
      %s90 = sor.u32 %s88, %s89
      %p91 = scmp.eq.s32.totalorder %s90, 0
      %s93 = sadd.s32 %s92, 1
      %s94 = scalar_select %p91, %s92, %s93
      %p97 = pneg %p91
      %p98 = scmp.eq.s32.totalorder %s14, 1
      %p99 = por %p97, %p98
      %p100 = scmp.ne.s32.totalorder %s92, %s95
      %p101 = scmp.eq.s32.totalorder %s14, 0
      %p102 = por %p100, %p101
      %p103 = scmp.ne.s32.totalorder %s92, %s95
      %p104 = scmp.eq.s32.totalorder %s19, 1
      %p105 = por %p103, %p104
      %p106 = scmp.ne.s32.totalorder %s95, %s96
      %p107 = scmp.eq.s32.totalorder %s19, 0
      %p108 = por %p106, %p107
      %p109 = scmp.ne.s32.totalorder %s95, %s96
      %p110 = scmp.eq.s32.totalorder %s20, 1
      %p111 = por %p109, %p110
      %p113 = scmp.ne.s32.totalorder %s96, %s112
      %p114 = scmp.eq.s32.totalorder %s20, 0
      %p115 = por %p113, %p114
      %p116 = scmp.le.s32.totalorder 1, %s14
      %p117 = scmp.lt.s32.totalorder %s14, 3
      %p118 = pnand %p116, %p117
      %p119 = pneg %p118
      // Predicated region
      $region9: #{tpu_custom_call.1} parent=5 // pred_check
        _
      $region10: #{tpu_custom_call.1} parent=5 // pred_check_branch
        %121 = sbr.rel (%p118) target = $region12
      $region11: #{tpu_custom_call.1} parent=5 // pred_region
        %s122 = ssub.s32 %s14, 1
      $region12: #{tpu_custom_call.1} parent=5 // pred_fallthru
        _
      %p123 = scmp.lt.s32.totalorder %s14, 2
      // Predicated region
      $region13: #{tpu_custom_call.1} parent=5 // pred_check
        %p124 = pneg %p123
      $region14: #{tpu_custom_call.1} parent=5 // pred_check_branch
        %126 = sbr.rel (%p124) target = $region16
      $region15: #{tpu_custom_call.1} parent=5 // pred_region
        // Predicated region
        $region17: #{tpu_custom_call.1} parent=15 // pred_check
          %p127 = pneg %p48
        $region18: #{tpu_custom_call.1} parent=15 // pred_check_branch
          %129 = sbr.rel (%p127) target = $region20
        $region19: #{tpu_custom_call.1} parent=15 // pred_region
          %s130 = sand.u32 %s38, 1
          %s131 = scalar_lea.sflag [#allocation3], %s130
          %s132 = sand.u32 %s38, 1
          %s133 = smul.addr %s132, 8
          %s134 = scalar_lea.vmem [#allocation2], %s133
          %s136 = ssub.s32 128, 128
          %137 = vsyncadd %s131, %s136
          %s138 = sadd.s32 %s22, %s21
          %s139 = smul.addr %s138, 128
          %s140 = scalar_lea.hbm %s0, %s139
          %s142 = sshll.u32 %s134, 4
          %s143 = int_to_ptr.vmem [resolvable:$true] %s142
          %145 = dma.hbm_to_vmem [thread:$0]  %s140, 128, %s143, %s131
        $region20: #{tpu_custom_call.1} parent=15 // pred_fallthru
          _
        // Predicated region
        $region21: #{tpu_custom_call.1} parent=15 // pred_check
          %p146 = pneg %p74
        $region22: #{tpu_custom_call.1} parent=15 // pred_check_branch
          %148 = sbr.rel (%p146) target = $region24
        $region23: #{tpu_custom_call.1} parent=15 // pred_region
          %p149 = scmp.lt.s32.totalorder %s21, 1
          %s150 = scalar_select %p149, %s21, 1
          %s151 = scalar_lea.vmem %s1, %s150
        $region24: #{tpu_custom_call.1} parent=15 // pred_fallthru
          _
      $region16: #{tpu_custom_call.1} parent=5 // pred_fallthru
        _
      %p152 = scmp.le.s32.totalorder 1, %s14
      %p153 = scmp.lt.s32.totalorder %s14, 3
      %p154 = pnand %p152, %p153
      %p155 = pneg %p154
      // Predicated region
      $region25: #{tpu_custom_call.1} parent=5 // pred_check
        _
      $region26: #{tpu_custom_call.1} parent=5 // pred_check_branch
        %157 = sbr.rel (%p154) target = $region28
      $region27: #{tpu_custom_call.1} parent=5 // pred_region
        %s158 = ssub.s32 %s14, 1
        %s159 = sand.u32 %s41, 1
        %s160 = scalar_lea.sflag [#allocation3], %s159
        %s161 = sand.u32 %s41, 1
        %s162 = smul.addr %s161, 8
        %s163 = scalar_lea.vmem [#allocation2], %s162
        // Predicated region
        $region29: #{tpu_custom_call.1} parent=27 // pred_check
          %p164 = pneg %p54
        $region30: #{tpu_custom_call.1} parent=27 // pred_check_branch
          %166 = sbr.rel (%p164) target = $region32
        $region31: #{tpu_custom_call.1} parent=27 // pred_region
          %167 = dma.done %s160, 128
        $region32: #{tpu_custom_call.1} parent=27 // pred_fallthru
          _
        %s168 = sand.u32 %s41, 1
        %s169 = scalar_lea.sflag [#allocation3], %s168
        %s170 = sand.u32 %s41, 1
        %s171 = smul.addr %s170, 8
        %s172 = scalar_lea.vmem [#allocation2], %s171
        %p173 = pneg %p54
        %p174 = pneg %p51
        %p175 = scmp.lt.s32.totalorder %s23, 1
        %s176 = scalar_select %p175, %s23, 1
        %s177 = scalar_lea.vmem %s1, %s176
        %p178 = pneg %p80
        %p179 = pneg %p77
        %p180 = pneg %p108
        %p181 = pneg %p105
        %s182 = sand.u32 %s95, 1
        %s183 = scalar_lea.sflag [#allocation4], %s182
        %s184 = sand.u32 %s95, 1
        %s185 = smul.addr %s184, 8
        %s186 = scalar_lea.vmem [#allocation5], %s185
        %p187 = scmp.lt.s32.totalorder %s23, 1
        %s188 = scalar_select %p187, %s23, 1
        %s189 = scalar_lea.vmem %s1, %s188
        %v190 = vld [vmem:[%s163] sm:$0xff]
        %v191 = vld [vmem:[%s189] sm:$0x1]
        %v193 = vlaneseq
        %v194 = vshrl.u32 %v193, 7
        %v195 = vsub.s32 0, %v194
        %v196 = vrot.slane %v191, %v195
        %v198 = vadd.f32 %v190, %v196
        %vm199 = vcmask 261120
        %200 = vst.msk [vmem:[%s186] sm:$0xff] %vm199, %v198
        %s201 = sand.u32 %s95, 1
        %s202 = scalar_lea.sflag [#allocation4], %s201
        %s203 = sand.u32 %s95, 1
        %s204 = smul.addr %s203, 8
        %s205 = scalar_lea.vmem [#allocation5], %s204
        // Predicated region
        $region33: #{tpu_custom_call.1} parent=27 // pred_check
          %p206 = pneg %p105
        $region34: #{tpu_custom_call.1} parent=27 // pred_check_branch
          %208 = sbr.rel (%p206) target = $region36
        $region35: #{tpu_custom_call.1} parent=27 // pred_region
          %s210 = ssub.s32 128, 128
          %211 = vsyncadd %s202, %s210
          %s212 = sadd.s32 %s24, %s23
          %s213 = smul.addr %s212, 128
          %s214 = scalar_lea.hbm %s2, %s213
          %s216 = sshll.u32 %s205, 4
          %s217 = int_to_ptr.vmem [resolvable:$true] %s216
          %219 = dma.vmem_to_hbm [thread:$0]  %s217, 128, %s214, %s202
        $region36: #{tpu_custom_call.1} parent=27 // pred_fallthru
          _
      $region28: #{tpu_custom_call.1} parent=5 // pred_fallthru
        _
      %p220 = scmp.le.s32.totalorder 2, %s14
      // Predicated region
      $region37: #{tpu_custom_call.1} parent=5 // pred_check
        %p221 = pneg %p220
      $region38: #{tpu_custom_call.1} parent=5 // pred_check_branch
        %223 = sbr.rel (%p221) target = $region40
      $region39: #{tpu_custom_call.1} parent=5 // pred_region
        %s224 = ssub.s32 %s14, 2
        // Predicated region
        $region41: #{tpu_custom_call.1} parent=39 // pred_check
          %p225 = pneg %p111
        $region42: #{tpu_custom_call.1} parent=39 // pred_check_branch
          %227 = sbr.rel (%p225) target = $region44
        $region43: #{tpu_custom_call.1} parent=39 // pred_region
          %s228 = sand.u32 %s96, 1
          %s229 = scalar_lea.sflag [#allocation4], %s228
          %s230 = sand.u32 %s96, 1
          %s231 = smul.addr %s230, 8
          %s232 = scalar_lea.vmem [#allocation5], %s231
          %233 = dma.done %s229, 128
        $region44: #{tpu_custom_call.1} parent=39 // pred_fallthru
          _
      $region40: #{tpu_custom_call.1} parent=5 // pred_fallthru
        _
    $region6: #{tpu_custom_call.1} parent=1 // loop_footer
      %s18 = sadd.s32 1, %s14
    $region7: #{tpu_custom_call.1} parent=1 // loop_footer_branch
      %13 = sbr.rel target = $region3
    $region8: #{tpu_custom_call.1} parent=1 // loop_exit
      _
    %234 = vsyncpa [#allocation3], 1
    %s235 = scalar_lea.sflag [#allocation3], 1
    %236 = vsyncpa %s235, 1
    %237 = vsyncpa [#allocation4], 1
    %s238 = scalar_lea.sflag [#allocation4], 1
    %239 = vsyncpa %s238, 1

</llo_original>
